<compile_context>
chip_gen: v7x
topology: tpu7x:2x2x1
jax: 0.10.0
libtpu: 0.0.40
codegen_flags: <defaults>
</compile_context>

<pallas_src>
import functools

import jax
import jax.numpy as jnp
from jax.experimental import pallas as pl
from jax.experimental.pallas import tpu as pltpu


NEG_SLOPE = 0.01   # nn.LeakyReLU default negative_slope
TILE_N = 256       # lane tile for the final layer (multiple of 128)


def _round_up(x, m):
    return (x + m - 1) // m * m


def _leaky_relu(h):
    return jnp.where(h > 0, h, NEG_SLOPE * h)


def fused_decoder_kernel(x_ref, w1_ref, b1_ref, w2_ref, b2_ref, w3_ref, b3_ref,
                         o_ref):
    """Fused 3-layer MLP covering both branches.

    bf16 operands on the MXU, f32 accumulation, f32 biases.  Layers 1/2 are
    recomputed per grid step (cheap, blocks are resident); layer 3 streams one
    TILE_N-wide slice of w3/b3 per step and writes one lane-dense output tile.
    """
    x = x_ref[...].astype(jnp.bfloat16)

    h = jnp.dot(x, w1_ref[...], preferred_element_type=jnp.float32) + b1_ref[...]
    h = _leaky_relu(h)

    h = jnp.dot(h.astype(jnp.bfloat16), w2_ref[...],
                preferred_element_type=jnp.float32) + b2_ref[...]
    h = _leaky_relu(h)

    h = jnp.dot(h.astype(jnp.bfloat16), w3_ref[...],
                preferred_element_type=jnp.float32) + b3_ref[...]

    # sigmoid(h) == 0.5 * tanh(0.5 * h) + 0.5   (tanh goes to the EUP slot)
    o_ref[...] = 0.5 * jnp.tanh(0.5 * h) + 0.5


def decoder_fc_with_pvp_axis(x, weights, *, output_pts):
    """Forward pass matching DecoderFCWithPVPAxis.forward (bn=False)."""
    B = x.shape[0]
    w1, b1 = weights["w1"], weights["b1"]
    w2, b2 = weights["w2"], weights["b2"]
    w3, b3 = weights["w3"], weights["b3"]

    n_total = w3.shape[1]                 # padded combined output width
    n_main = 3 * output_pts
    n_main_pad = _round_up(n_main, TILE_N)
    num_tiles = n_total // TILE_N

    out = pl.pallas_call(
        fused_decoder_kernel,
        out_shape=jax.ShapeDtypeStruct((B, n_total), jnp.float32),
        grid=(num_tiles,),
        in_specs=[
            pl.BlockSpec(x.shape, lambda j: (0, 0)),          # x (resident)
            pl.BlockSpec(w1.shape, lambda j: (0, 0)),          # w1 (resident)
            pl.BlockSpec(b1.shape, lambda j: (0, 0)),
            pl.BlockSpec(w2.shape, lambda j: (0, 0)),          # w2 (resident)
            pl.BlockSpec(b2.shape, lambda j: (0, 0)),
            pl.BlockSpec((w3.shape[0], TILE_N), lambda j: (0, j)),  # w3 streamed
            pl.BlockSpec((1, TILE_N), lambda j: (0, j)),            # b3 streamed
        ],
        out_specs=pl.BlockSpec((B, TILE_N), lambda j: (0, j)),
        compiler_params=pltpu.CompilerParams(
            dimension_semantics=("parallel",)),
    )(x, w1, b1, w2, b2, w3, b3)

    pts = out[:, :n_main].reshape(-1, 3, output_pts)
    ppv = out[:, n_main_pad:n_main_pad + 6]
    pivot_point = ppv[:, :3]
    central_point = ppv[:, 3:]
    return pts, pivot_point, central_point


# ----------------------------------------------------------------------------
# Parameter construction / packing
# ----------------------------------------------------------------------------

def init_linear(key, in_f, out_f):
    """Synthetic nn.Linear params: W stored as (in, out), b as (1, out)."""
    kw, kb = jax.random.split(key)
    bound = 1.0 / jnp.sqrt(jnp.float32(in_f))
    w = jax.random.uniform(kw, (in_f, out_f), jnp.float32, -bound, bound)
    b = jax.random.uniform(kb, (1, out_f), jnp.float32, -bound, bound)
    return w, b


def init_params(key, latent_dim, n_features, output_pts):
    keys = jax.random.split(key, 6)
    # main branch: latent -> nf0 -> nf1 -> output_pts*3
    w1, b1 = init_linear(keys[0], latent_dim, n_features[0])
    w2, b2 = init_linear(keys[1], n_features[0], n_features[1])
    w3, b3 = init_linear(keys[2], n_features[1], output_pts * 3)
    # ppv branch: latent -> nf0 -> nf1 -> 6
    pw1, pb1 = init_linear(keys[3], latent_dim, n_features[0])
    pw2, pb2 = init_linear(keys[4], n_features[0], n_features[1])
    pw3, pb3 = init_linear(keys[5], n_features[1], 6)
    return dict(main=(w1, b1, w2, b2, w3, b3),
                ppv=(pw1, pb1, pw2, pb2, pw3, pb3))


def pack_params(params):
    """Fuse both branches into one set of (bf16) weight matrices.

    Layer 1: concat along the output dim.  Layers 2/3: block-diagonal.  The
    final layer's columns are lane-padded per branch to a multiple of TILE_N
    so kernel stores are lane-dense; padded columns are sliced off in JAX.
    """
    w1, b1, w2, b2, w3, b3 = params["main"]
    pw1, pb1, pw2, pb2, pw3, pb3 = params["ppv"]

    nf0 = w1.shape[1]
    nf1 = w2.shape[1]
    n_main = w3.shape[1]
    n_ppv = pw3.shape[1]
    n_main_pad = _round_up(n_main, TILE_N)
    n_ppv_pad = _round_up(n_ppv, TILE_N)
    n_total = n_main_pad + n_ppv_pad

    w1c = jnp.concatenate([w1, pw1], axis=1)                      # (latent, 2*nf0)
    b1c = jnp.concatenate([b1, pb1], axis=1)

    w2c = jnp.zeros((2 * nf0, 2 * nf1), jnp.float32)
    w2c = w2c.at[:nf0, :nf1].set(w2).at[nf0:, nf1:].set(pw2)       # block-diag
    b2c = jnp.concatenate([b2, pb2], axis=1)

    w3c = jnp.zeros((2 * nf1, n_total), jnp.float32)
    w3c = w3c.at[:nf1, :n_main].set(w3)
    w3c = w3c.at[nf1:, n_main_pad:n_main_pad + n_ppv].set(pw3)
    b3c = jnp.zeros((1, n_total), jnp.float32)
    b3c = b3c.at[:, :n_main].set(b3)
    b3c = b3c.at[:, n_main_pad:n_main_pad + n_ppv].set(pb3)

    return dict(
        w1=w1c.astype(jnp.bfloat16), b1=b1c,
        w2=w2c.astype(jnp.bfloat16), b2=b2c,
        w3=w3c.astype(jnp.bfloat16), b3=b3c,
    )


# ----------------------------------------------------------------------------
# Pure-JAX reference (mimics the kernel's bf16-weight / f32-accumulate path)
# ----------------------------------------------------------------------------

def _reference(x, params, output_pts):
    def dense(h, w, b):
        return jnp.dot(h.astype(jnp.bfloat16), w.astype(jnp.bfloat16),
                       preferred_element_type=jnp.float32) + b

    def branch(h, w1, b1, w2, b2, w3, b3):
        h = _leaky_relu(dense(h, w1, b1))
        h = _leaky_relu(dense(h, w2, b2))
        return jax.nn.sigmoid(dense(h, w3, b3))

    out = branch(x, *params["main"]).reshape(-1, 3, output_pts)
    ppv = branch(x, *params["ppv"]).reshape(-1, 6)
    return out, ppv[:, :3], ppv[:, 3:]


if __name__ == "__main__":
    # Small shapes consistent with the module.
    B = 2
    LATENT_DIM = 64
    N_FEATURES = (64, 64)
    OUTPUT_PTS = 64

    key = jax.random.PRNGKey(0)
    k_x, k_p = jax.random.split(key)
    x = jax.random.normal(k_x, (B, LATENT_DIM), jnp.float32)
    params = init_params(k_p, LATENT_DIM, N_FEATURES, OUTPUT_PTS)
    weights = pack_params(params)

    fwd = jax.jit(functools.partial(decoder_fc_with_pvp_axis,
                                    output_pts=OUTPUT_PTS))
    pts, pivot_point, central_point = fwd(x, weights)
    jax.block_until_ready((pts, pivot_point, central_point))

    # Correctness check against the pure-JAX reference.
    r_pts, r_piv, r_cen = _reference(x, params, OUTPUT_PTS)
    assert pts.shape == (B, 3, OUTPUT_PTS)
    assert pivot_point.shape == (B, 3) and central_point.shape == (B, 3)
    assert jnp.allclose(pts, r_pts, atol=2e-3)
    assert jnp.allclose(pivot_point, r_piv, atol=2e-3)
    assert jnp.allclose(central_point, r_cen, atol=2e-3)

    print("KERNEL_OK")
</pallas_src>

<mosaic_0001>
module attributes {stable_mosaic.version = 11 : i64} {
  func.func @fused_decoder_kernel(%arg0: i32, %arg1: memref<2x64xf32, #tpu.memory_space<vmem>>, %arg2: memref<64x128xbf16, #tpu.memory_space<vmem>>, %arg3: memref<1x128xf32, #tpu.memory_space<vmem>>, %arg4: memref<128x128xbf16, #tpu.memory_space<vmem>>, %arg5: memref<1x128xf32, #tpu.memory_space<vmem>>, %arg6: memref<128x256xbf16, #tpu.memory_space<vmem>>, %arg7: memref<1x256xf32, #tpu.memory_space<vmem>>, %arg8: memref<2x256xf32, #tpu.memory_space<vmem>>) attributes {dimension_semantics = [#tpu.dimension_semantics<parallel>], iteration_bounds = array<i64: 2>, scalar_prefetch = 0 : i64, scratch_operands = 0 : i64, tpu.core_type = #tpu.core_type<tc>, window_params = [{pipeline_mode = #tpu.pipeline_mode<synchronous>, transform_indices = @transform_0, window_bounds = array<i64: 2, 64>}, {pipeline_mode = #tpu.pipeline_mode<synchronous>, transform_indices = @transform_1, window_bounds = array<i64: 64, 128>}, {pipeline_mode = #tpu.pipeline_mode<synchronous>, transform_indices = @transform_2, window_bounds = array<i64: 1, 128>}, {pipeline_mode = #tpu.pipeline_mode<synchronous>, transform_indices = @transform_3, window_bounds = array<i64: 128, 128>}, {pipeline_mode = #tpu.pipeline_mode<synchronous>, transform_indices = @transform_4, window_bounds = array<i64: 1, 128>}, {transform_indices = @transform_5, window_bounds = array<i64: 128, 256>}, {transform_indices = @transform_6, window_bounds = array<i64: 1, 256>}, {transform_indices = @transform_7, window_bounds = array<i64: 2, 256>}]} {
    %c0 = arith.constant 0 : index
    %c0_0 = arith.constant 0 : index
    %0 = vector.load %arg1[%c0, %c0_0] : memref<2x64xf32, #tpu.memory_space<vmem>>, vector<2x64xf32>
    %1 = arith.truncf %0 : vector<2x64xf32> to vector<2x64xbf16>
    %c0_1 = arith.constant 0 : index
    %c0_2 = arith.constant 0 : index
    %2 = vector.load %arg2[%c0_1, %c0_2] : memref<64x128xbf16, #tpu.memory_space<vmem>>, vector<64x128xbf16>
    %cst = arith.constant dense<0.000000e+00> : vector<2x128xf32>
    %3 = tpu.matmul %1, %2, %cst {dimension_numbers = #tpu.dot_dimension_numbers<[1], [0], [0], [1], [0, 0, 1, 1], [], []>} : vector<2x64xbf16>, vector<64x128xbf16>, vector<2x128xf32> -> vector<2x128xf32>
    %c0_3 = arith.constant 0 : index
    %c0_4 = arith.constant 0 : index
    %4 = vector.load %arg3[%c0_3, %c0_4] : memref<1x128xf32, #tpu.memory_space<vmem>>, vector<1x128xf32>
    %5 = vector.broadcast %4 : vector<1x128xf32> to vector<2x128xf32>
    %6 = arith.addf %3, %5 : vector<2x128xf32>
    %cst_5 = arith.constant 0.000000e+00 : f32
    %7 = vector.broadcast %cst_5 : f32 to vector<2x128xf32>
    %8 = arith.cmpf ogt, %6, %7 : vector<2x128xf32>
    %cst_6 = arith.constant 0.00999999977 : f32
    %9 = vector.broadcast %cst_6 : f32 to vector<2x128xf32>
    %10 = arith.mulf %9, %6 : vector<2x128xf32>
    %11 = arith.select %8, %6, %10 : vector<2x128xi1>, vector<2x128xf32>
    %12 = arith.truncf %11 : vector<2x128xf32> to vector<2x128xbf16>
    %c0_7 = arith.constant 0 : index
    %c0_8 = arith.constant 0 : index
    %13 = vector.load %arg4[%c0_7, %c0_8] : memref<128x128xbf16, #tpu.memory_space<vmem>>, vector<128x128xbf16>
    %cst_9 = arith.constant dense<0.000000e+00> : vector<2x128xf32>
    %14 = tpu.matmul %12, %13, %cst_9 {dimension_numbers = #tpu.dot_dimension_numbers<[1], [0], [0], [1], [0, 0, 1, 1], [], []>} : vector<2x128xbf16>, vector<128x128xbf16>, vector<2x128xf32> -> vector<2x128xf32>
    %c0_10 = arith.constant 0 : index
    %c0_11 = arith.constant 0 : index
    %15 = vector.load %arg5[%c0_10, %c0_11] : memref<1x128xf32, #tpu.memory_space<vmem>>, vector<1x128xf32>
    %16 = vector.broadcast %15 : vector<1x128xf32> to vector<2x128xf32>
    %17 = arith.addf %14, %16 : vector<2x128xf32>
    %cst_12 = arith.constant 0.000000e+00 : f32
    %18 = vector.broadcast %cst_12 : f32 to vector<2x128xf32>
    %19 = arith.cmpf ogt, %17, %18 : vector<2x128xf32>
    %cst_13 = arith.constant 0.00999999977 : f32
    %20 = vector.broadcast %cst_13 : f32 to vector<2x128xf32>
    %21 = arith.mulf %20, %17 : vector<2x128xf32>
    %22 = arith.select %19, %17, %21 : vector<2x128xi1>, vector<2x128xf32>
    %23 = arith.truncf %22 : vector<2x128xf32> to vector<2x128xbf16>
    %c0_14 = arith.constant 0 : index
    %c0_15 = arith.constant 0 : index
    %24 = vector.load %arg6[%c0_14, %c0_15] : memref<128x256xbf16, #tpu.memory_space<vmem>>, vector<128x256xbf16>
    %cst_16 = arith.constant dense<0.000000e+00> : vector<2x256xf32>
    %25 = tpu.matmul %23, %24, %cst_16 {dimension_numbers = #tpu.dot_dimension_numbers<[1], [0], [0], [1], [0, 0, 1, 1], [], []>} : vector<2x128xbf16>, vector<128x256xbf16>, vector<2x256xf32> -> vector<2x256xf32>
    %c0_17 = arith.constant 0 : index
    %c0_18 = arith.constant 0 : index
    %26 = vector.load %arg7[%c0_17, %c0_18] : memref<1x256xf32, #tpu.memory_space<vmem>>, vector<1x256xf32>
    %27 = vector.broadcast %26 : vector<1x256xf32> to vector<2x256xf32>
    %28 = arith.addf %25, %27 : vector<2x256xf32>
    %cst_19 = arith.constant 5.000000e-01 : f32
    %29 = vector.broadcast %cst_19 : f32 to vector<2x256xf32>
    %30 = arith.mulf %29, %28 : vector<2x256xf32>
    %31 = math.tanh %30 : vector<2x256xf32>
    %cst_20 = arith.constant 5.000000e-01 : f32
    %32 = vector.broadcast %cst_20 : f32 to vector<2x256xf32>
    %33 = arith.mulf %32, %31 : vector<2x256xf32>
    %cst_21 = arith.constant 5.000000e-01 : f32
    %34 = vector.broadcast %cst_21 : f32 to vector<2x256xf32>
    %35 = arith.addf %33, %34 : vector<2x256xf32>
    %c0_22 = arith.constant 0 : index
    %c0_23 = arith.constant 0 : index
    %36 = vector.load %arg8[%c0_22, %c0_23] : memref<2x256xf32, #tpu.memory_space<vmem>>, vector<2x256xf32>
    tpu.vector_store %arg8[%c0_22, %c0_23], %35 {strides = array<i32>} : memref<2x256xf32, #tpu.memory_space<vmem>>, vector<2x256xf32>,
    return
  }
  func.func @transform_0(%arg0: i32) -> (i32, i32) {
    %c0_i32 = arith.constant 0 : i32
    %c0_i32_0 = arith.constant 0 : i32
    %c0_i32_1 = arith.constant 0 : i32
    return %c0_i32, %c0_i32_0 : i32, i32
  }
  func.func @transform_1(%arg0: i32) -> (i32, i32) {
    %c0_i32 = arith.constant 0 : i32
    %c0_i32_0 = arith.constant 0 : i32
    %c0_i32_1 = arith.constant 0 : i32
    return %c0_i32, %c0_i32_0 : i32, i32
  }
  func.func @transform_2(%arg0: i32) -> (i32, i32) {
    %c0_i32 = arith.constant 0 : i32
    %c0_i32_0 = arith.constant 0 : i32
    %c0_i32_1 = arith.constant 0 : i32
    return %c0_i32, %c0_i32_0 : i32, i32
  }
  func.func @transform_3(%arg0: i32) -> (i32, i32) {
    %c0_i32 = arith.constant 0 : i32
    %c0_i32_0 = arith.constant 0 : i32
    %c0_i32_1 = arith.constant 0 : i32
    return %c0_i32, %c0_i32_0 : i32, i32
  }
  func.func @transform_4(%arg0: i32) -> (i32, i32) {
    %c0_i32 = arith.constant 0 : i32
    %c0_i32_0 = arith.constant 0 : i32
    %c0_i32_1 = arith.constant 0 : i32
    return %c0_i32, %c0_i32_0 : i32, i32
  }
  func.func @transform_5(%arg0: i32) -> (i32, i32) {
    %c0_i32 = arith.constant 0 : i32
    %c0_i32_0 = arith.constant 0 : i32
    return %c0_i32, %arg0 : i32, i32
  }
  func.func @transform_6(%arg0: i32) -> (i32, i32) {
    %c0_i32 = arith.constant 0 : i32
    %c0_i32_0 = arith.constant 0 : i32
    return %c0_i32, %arg0 : i32, i32
  }
  func.func @transform_7(%arg0: i32) -> (i32, i32) {
    %c0_i32 = arith.constant 0 : i32
    %c0_i32_0 = arith.constant 0 : i32
    return %c0_i32, %arg0 : i32, i32
  }
}

</mosaic_0001>

<llo_original>
// kernel: decoder_fc_with_pvp_axis.1
$region0: #{decoder_fc_with_pvp_axis.1}
  #allocation0 [shape = 'u32[]', space=smem, size = 0x4, offset = 0x4, fixed_abs, tag = 'smem constant byte address 0x4 - core index']
  #allocation1 [shape = 'u32[144,128]{1,0:T(1,128)}', space=vmem, size = 0x12000, scoped, tag = 'internal scratch']
  %s0 = inlined_call_operand.hbm [shape: f32[2,64], index: 0, kind: input, shape index: {}]
  %s1 = inlined_call_operand.hbm [shape: bf16[64,128], index: 1, kind: input, shape index: {}]
  %s2 = inlined_call_operand.vmem [shape: f32[1,128], index: 2, kind: input, shape index: {}]
  %s3 = inlined_call_operand.hbm [shape: bf16[128,128], index: 3, kind: input, shape index: {}]
  %s4 = inlined_call_operand.vmem [shape: f32[1,128], index: 4, kind: input, shape index: {}]
  %s5 = inlined_call_operand.hbm [shape: bf16[128,512], index: 5, kind: input, shape index: {}]
  %s6 = inlined_call_operand.vmem [shape: f32[1,512], index: 6, kind: input, shape index: {}]
  %s7 = inlined_call_operand.vmem [shape: f32[2,512], index: 7, kind: output, shape index: {}]
  %s8 = sld [smem:[#allocation0]]
  $region77: #{decoder_fc_with_pvp_axis.1} parent=0
    _
  %s10 = ssub.s32 1, %s8
  %s11 = scalar_select 0, %s10, %s8
  $region1: #{decoder_fc_with_pvp_axis.1} parent=0
    #allocation2 [shape = 'u8[1024]{0}', space=vmem, size = 0x400, scoped, tag = 'input window, operand 0, single buffered']
    #allocation3 [shape = 's32[2]{0}', space=sflag, size = 0x8, scoped, tag = 'scoped memory for decoder_fc_with_pvp_axis.1']
    #allocation4 [shape = 'u8[16384]{0}', space=vmem, size = 0x4000, scoped, tag = 'input window, operand 1, single buffered']
    #allocation5 [shape = 's32[1]{0}', space=sflag, size = 0x4, scoped, tag = 'scoped memory for decoder_fc_with_pvp_axis.1']
    #allocation6 [shape = 'u8[32768]{0}', space=vmem, size = 0x8000, scoped, tag = 'input window, operand 3, single buffered']
    #allocation7 [shape = 'u8[131072]{0}', space=vmem, size = 0x20000, scoped, tag = 'input window, operand 5']
    #allocation8 [shape = 's32[2]{0}', space=sflag, size = 0x8, scoped, tag = 'scoped memory for decoder_fc_with_pvp_axis.1']
    %12 = vsyncpa [#allocation3], 0
    %13 = vsyncpa [#allocation5], 0
    %14 = vsyncpa [#allocation8], 0
    %s15 = scalar_lea.sflag [#allocation8], 1
    %16 = vsyncpa %s15, 0
    loop: start=0, step=1, limit=4
    $region2: #{decoder_fc_with_pvp_axis.1} parent=1 // loop_pre_header
      _
    $region3: #{decoder_fc_with_pvp_axis.1} parent=1 // loop_header
      %s18 = sphi 0, %s22
      %p19 = scmp.ge.s32.totalorder %s18, 4
      %s26 = sphi 0, %s26
      %s28 = sphi 0, %s26
      %s29 = sphi 0, %s28
      %s43 = sphi 0, %s29
      %s47 = sphi 0, %s47
      %s49 = sphi 0, %s47
      %s50 = sphi 0, %s49
      %s64 = sphi 0, %s50
      %s68 = sphi 0, %s68
      %s70 = sphi 0, %s68
      %s71 = sphi 0, %s70
      %s85 = sphi 0, %s71
      %s89 = sphi 0, %s89
      %s91 = sphi 0, %s89
      %s92 = sphi 0, %s91
      %s106 = sphi 0, %s92
      %s110 = sphi 0, %s110
      %s112 = sphi 0, %s110
      %s113 = sphi 0, %s112
      %s127 = sphi 0, %s113
      %s133 = sphi 0, %s135
      %s136 = sphi 0, %s133
      %s137 = sphi 0, %s136
      %s153 = sphi 0, %s137
      %s159 = sphi 0, %s161
      %s162 = sphi 0, %s159
      %s163 = sphi 0, %s162
      %s179 = sphi 0, %s163
      %s185 = sphi 0, %s187
      %s188 = sphi 0, %s185
      %s189 = sphi 0, %s188
      %s205 = sphi 0, %s189
    $region4: #{decoder_fc_with_pvp_axis.1} parent=1 // loop_header_branch
      %21 = sbr.rel (%p19) target = $region8
    $region5: #{decoder_fc_with_pvp_axis.1} parent=1 // loop_body
      %s23 = ssub.s32 %s18, 1
      %s24 = ssub.s32 %s18, 2
      %s25 = sadd.s32 %s18, 1
      %s27 = sadd.s32 %s26, 1
      %p30 = scmp.eq.s32.totalorder %s18, 1
      %p31 = scmp.ne.s32.totalorder %s26, %s28
      %p32 = scmp.eq.s32.totalorder %s18, 0
      %p33 = por %p31, %p32
      %p34 = scmp.ne.s32.totalorder %s26, %s28
      %p35 = scmp.eq.s32.totalorder %s23, 1
      %p36 = por %p34, %p35
      %p37 = scmp.ne.s32.totalorder %s28, %s29
      %p38 = scmp.eq.s32.totalorder %s23, 0
      %p39 = por %p37, %p38
      %p40 = scmp.ne.s32.totalorder %s28, %s29
      %p41 = scmp.eq.s32.totalorder %s24, 1
      %p42 = por %p40, %p41
      %p44 = scmp.ne.s32.totalorder %s29, %s43
      %p45 = scmp.eq.s32.totalorder %s24, 0
      %p46 = por %p44, %p45
      %s48 = sadd.s32 %s47, 1
      %p51 = scmp.eq.s32.totalorder %s18, 1
      %p52 = scmp.ne.s32.totalorder %s47, %s49
      %p53 = scmp.eq.s32.totalorder %s18, 0
      %p54 = por %p52, %p53
      %p55 = scmp.ne.s32.totalorder %s47, %s49
      %p56 = scmp.eq.s32.totalorder %s23, 1
      %p57 = por %p55, %p56
      %p58 = scmp.ne.s32.totalorder %s49, %s50
      %p59 = scmp.eq.s32.totalorder %s23, 0
      %p60 = por %p58, %p59
      %p61 = scmp.ne.s32.totalorder %s49, %s50
      %p62 = scmp.eq.s32.totalorder %s24, 1
      %p63 = por %p61, %p62
      %p65 = scmp.ne.s32.totalorder %s50, %s64
      %p66 = scmp.eq.s32.totalorder %s24, 0
      %p67 = por %p65, %p66
      %s69 = sadd.s32 %s68, 1
      %p72 = scmp.eq.s32.totalorder %s18, 1
      %p73 = scmp.ne.s32.totalorder %s68, %s70
      %p74 = scmp.eq.s32.totalorder %s18, 0
      %p75 = por %p73, %p74
      %p76 = scmp.ne.s32.totalorder %s68, %s70
      %p77 = scmp.eq.s32.totalorder %s23, 1
      %p78 = por %p76, %p77
      %p79 = scmp.ne.s32.totalorder %s70, %s71
      %p80 = scmp.eq.s32.totalorder %s23, 0
      %p81 = por %p79, %p80
      %p82 = scmp.ne.s32.totalorder %s70, %s71
      %p83 = scmp.eq.s32.totalorder %s24, 1
      %p84 = por %p82, %p83
      %p86 = scmp.ne.s32.totalorder %s71, %s85
      %p87 = scmp.eq.s32.totalorder %s24, 0
      %p88 = por %p86, %p87
      %s90 = sadd.s32 %s89, 1
      %p93 = scmp.eq.s32.totalorder %s18, 1
      %p94 = scmp.ne.s32.totalorder %s89, %s91
      %p95 = scmp.eq.s32.totalorder %s18, 0
      %p96 = por %p94, %p95
      %p97 = scmp.ne.s32.totalorder %s89, %s91
      %p98 = scmp.eq.s32.totalorder %s23, 1
      %p99 = por %p97, %p98
      %p100 = scmp.ne.s32.totalorder %s91, %s92
      %p101 = scmp.eq.s32.totalorder %s23, 0
      %p102 = por %p100, %p101
      %p103 = scmp.ne.s32.totalorder %s91, %s92
      %p104 = scmp.eq.s32.totalorder %s24, 1
      %p105 = por %p103, %p104
      %p107 = scmp.ne.s32.totalorder %s92, %s106
      %p108 = scmp.eq.s32.totalorder %s24, 0
      %p109 = por %p107, %p108
      %s111 = sadd.s32 %s110, 1
      %p114 = scmp.eq.s32.totalorder %s18, 1
      %p115 = scmp.ne.s32.totalorder %s110, %s112
      %p116 = scmp.eq.s32.totalorder %s18, 0
      %p117 = por %p115, %p116
      %p118 = scmp.ne.s32.totalorder %s110, %s112
      %p119 = scmp.eq.s32.totalorder %s23, 1
      %p120 = por %p118, %p119
      %p121 = scmp.ne.s32.totalorder %s112, %s113
      %p122 = scmp.eq.s32.totalorder %s23, 0
      %p123 = por %p121, %p122
      %p124 = scmp.ne.s32.totalorder %s112, %s113
      %p125 = scmp.eq.s32.totalorder %s24, 1
      %p126 = por %p124, %p125
      %p128 = scmp.ne.s32.totalorder %s113, %s127
      %p129 = scmp.eq.s32.totalorder %s24, 0
      %p130 = por %p128, %p129
      %s131 = ssub.s32 %s18, %s25
      %p132 = scmp.eq.s32.totalorder %s131, 0
      %s134 = sadd.s32 %s133, 1
      %s135 = scalar_select %p132, %s133, %s134
      %p138 = pneg %p132
      %p139 = scmp.eq.s32.totalorder %s18, 1
      %p140 = por %p138, %p139
      %p141 = scmp.ne.s32.totalorder %s133, %s136
      %p142 = scmp.eq.s32.totalorder %s18, 0
      %p143 = por %p141, %p142
      %p144 = scmp.ne.s32.totalorder %s133, %s136
      %p145 = scmp.eq.s32.totalorder %s23, 1
      %p146 = por %p144, %p145
      %p147 = scmp.ne.s32.totalorder %s136, %s137
      %p148 = scmp.eq.s32.totalorder %s23, 0
      %p149 = por %p147, %p148
      %p150 = scmp.ne.s32.totalorder %s136, %s137
      %p151 = scmp.eq.s32.totalorder %s24, 1
      %p152 = por %p150, %p151
      %p154 = scmp.ne.s32.totalorder %s137, %s153
      %p155 = scmp.eq.s32.totalorder %s24, 0
      %p156 = por %p154, %p155
      %s157 = ssub.s32 %s18, %s25
      %p158 = scmp.eq.s32.totalorder %s157, 0
      %s160 = sadd.s32 %s159, 1
      %s161 = scalar_select %p158, %s159, %s160
      %p164 = pneg %p158
      %p165 = scmp.eq.s32.totalorder %s18, 1
      %p166 = por %p164, %p165
      %p167 = scmp.ne.s32.totalorder %s159, %s162
      %p168 = scmp.eq.s32.totalorder %s18, 0
      %p169 = por %p167, %p168
      %p170 = scmp.ne.s32.totalorder %s159, %s162
      %p171 = scmp.eq.s32.totalorder %s23, 1
      %p172 = por %p170, %p171
      %p173 = scmp.ne.s32.totalorder %s162, %s163
      %p174 = scmp.eq.s32.totalorder %s23, 0
      %p175 = por %p173, %p174
      %p176 = scmp.ne.s32.totalorder %s162, %s163
      %p177 = scmp.eq.s32.totalorder %s24, 1
      %p178 = por %p176, %p177
      %p180 = scmp.ne.s32.totalorder %s163, %s179
      %p181 = scmp.eq.s32.totalorder %s24, 0
      %p182 = por %p180, %p181
      %s183 = ssub.s32 %s18, %s25
      %p184 = scmp.eq.s32.totalorder %s183, 0
      %s186 = sadd.s32 %s185, 1
      %s187 = scalar_select %p184, %s185, %s186
      %p190 = pneg %p184
      %p191 = scmp.eq.s32.totalorder %s18, 1
      %p192 = por %p190, %p191
      %p193 = scmp.ne.s32.totalorder %s185, %s188
      %p194 = scmp.eq.s32.totalorder %s18, 0
      %p195 = por %p193, %p194
      %p196 = scmp.ne.s32.totalorder %s185, %s188
      %p197 = scmp.eq.s32.totalorder %s23, 1
      %p198 = por %p196, %p197
      %p199 = scmp.ne.s32.totalorder %s188, %s189
      %p200 = scmp.eq.s32.totalorder %s23, 0
      %p201 = por %p199, %p200
      %p202 = scmp.ne.s32.totalorder %s188, %s189
      %p203 = scmp.eq.s32.totalorder %s24, 1
      %p204 = por %p202, %p203
      %p206 = scmp.ne.s32.totalorder %s189, %s205
      %p207 = scmp.eq.s32.totalorder %s24, 0
      %p208 = por %p206, %p207
      %p209 = scmp.le.s32.totalorder 1, %s18
      %p210 = scmp.lt.s32.totalorder %s18, 3
      %p211 = pnand %p209, %p210
      %p212 = pneg %p211
      // Predicated region
      $region9: #{decoder_fc_with_pvp_axis.1} parent=5 // pred_check
        _
      $region10: #{decoder_fc_with_pvp_axis.1} parent=5 // pred_check_branch
        %214 = sbr.rel (%p211) target = $region12
      $region11: #{decoder_fc_with_pvp_axis.1} parent=5 // pred_region
        %s215 = ssub.s32 %s18, 1
        // Predicated region
        $region13: #{decoder_fc_with_pvp_axis.1} parent=11 // pred_check
          %p216 = pneg %p39
        $region14: #{decoder_fc_with_pvp_axis.1} parent=11 // pred_check_branch
          %218 = sbr.rel (%p216) target = $region16
        $region15: #{decoder_fc_with_pvp_axis.1} parent=11 // pred_region
          %s220 = ssub.s32 32, 32
          %221 = vsyncadd [#allocation3], %s220
          %s223 = sshll.u32 [#allocation2], 4
          %s224 = int_to_ptr.vmem [resolvable:$true] %s223
          %226 = dma.hbm_to_vmem [thread:$0]  %s0, 32, %s224, [#allocation3]
        $region16: #{decoder_fc_with_pvp_axis.1} parent=11 // pred_fallthru
          _
        // Predicated region
        $region17: #{decoder_fc_with_pvp_axis.1} parent=11 // pred_check
          %p227 = pneg %p60
        $region18: #{decoder_fc_with_pvp_axis.1} parent=11 // pred_check_branch
          %229 = sbr.rel (%p227) target = $region20
        $region19: #{decoder_fc_with_pvp_axis.1} parent=11 // pred_region
          %s231 = ssub.s32 512, 512
          %232 = vsyncadd [#allocation5], %s231
          %s233 = sshll.u32 [#allocation4], 4
          %s234 = int_to_ptr.vmem [resolvable:$true] %s233
          %239 = dma.hbm_to_vmem [thread:$0]  %s1, 512, %s234, [#allocation5], 64, 64, 4
        $region20: #{decoder_fc_with_pvp_axis.1} parent=11 // pred_fallthru
          _
        // Predicated region
        $region21: #{decoder_fc_with_pvp_axis.1} parent=11 // pred_check
          %p240 = pneg %p81
        $region22: #{decoder_fc_with_pvp_axis.1} parent=11 // pred_check_branch
          %242 = sbr.rel (%p240) target = $region24
        $region23: #{decoder_fc_with_pvp_axis.1} parent=11 // pred_region
          _
        $region24: #{decoder_fc_with_pvp_axis.1} parent=11 // pred_fallthru
          _
        // Predicated region
        $region25: #{decoder_fc_with_pvp_axis.1} parent=11 // pred_check
          %p243 = pneg %p102
        $region26: #{decoder_fc_with_pvp_axis.1} parent=11 // pred_check_branch
          %245 = sbr.rel (%p243) target = $region28
        $region27: #{decoder_fc_with_pvp_axis.1} parent=11 // pred_region
          %s247 = ssub.s32 1024, 1024
          %248 = vsyncadd [#allocation5], %s247
          %s249 = sshll.u32 [#allocation6], 4
          %s250 = int_to_ptr.vmem [resolvable:$true] %s249
          %255 = dma.hbm_to_vmem [thread:$0]  %s3, 1024, %s250, [#allocation5], 64, 64, 4
        $region28: #{decoder_fc_with_pvp_axis.1} parent=11 // pred_fallthru
          _
        // Predicated region
        $region29: #{decoder_fc_with_pvp_axis.1} parent=11 // pred_check
          %p256 = pneg %p123
        $region30: #{decoder_fc_with_pvp_axis.1} parent=11 // pred_check_branch
          %258 = sbr.rel (%p256) target = $region32
        $region31: #{decoder_fc_with_pvp_axis.1} parent=11 // pred_region
          _
        $region32: #{decoder_fc_with_pvp_axis.1} parent=11 // pred_fallthru
          _
      $region12: #{decoder_fc_with_pvp_axis.1} parent=5 // pred_fallthru
        _
      %p259 = scmp.lt.s32.totalorder %s18, 2
      // Predicated region
      $region33: #{decoder_fc_with_pvp_axis.1} parent=5 // pred_check
        %p260 = pneg %p259
      $region34: #{decoder_fc_with_pvp_axis.1} parent=5 // pred_check_branch
        %262 = sbr.rel (%p260) target = $region36
      $region35: #{decoder_fc_with_pvp_axis.1} parent=5 // pred_region
        // Predicated region
        $region37: #{decoder_fc_with_pvp_axis.1} parent=35 // pred_check
          %p263 = pneg %p143
        $region38: #{decoder_fc_with_pvp_axis.1} parent=35 // pred_check_branch
          %265 = sbr.rel (%p263) target = $region40
        $region39: #{decoder_fc_with_pvp_axis.1} parent=35 // pred_region
          %s266 = sand.u32 %s133, 1
          %s267 = scalar_lea.sflag [#allocation8], %s266
          %s268 = sand.u32 %s133, 1
          %s269 = smul.addr %s268, 128
          %s270 = scalar_lea.vmem [#allocation7], %s269
          %s271 = smul.u32 2, %s18
          %s273 = ssub.s32 2048, 2048
          %274 = vsyncadd %s267, %s273
          %s275 = smul.addr %s271, 64
          %s276 = scalar_lea.hbm %s5, %s275
          %s277 = sshll.u32 %s270, 4
          %s278 = int_to_ptr.vmem [resolvable:$true] %s277
          %283 = dma.hbm_to_vmem [thread:$0]  %s276, 2048, %s278, %s267, 256, 128, 8
        $region40: #{decoder_fc_with_pvp_axis.1} parent=35 // pred_fallthru
          _
        // Predicated region
        $region41: #{decoder_fc_with_pvp_axis.1} parent=35 // pred_check
          %p284 = pneg %p169
        $region42: #{decoder_fc_with_pvp_axis.1} parent=35 // pred_check_branch
          %286 = sbr.rel (%p284) target = $region44
        $region43: #{decoder_fc_with_pvp_axis.1} parent=35 // pred_region
          %s287 = smul.u32 2, %s18
          %p288 = scmp.lt.s32.totalorder %s287, 3
          %s289 = scalar_select %p288, %s287, 3
          %s290 = scalar_lea.vmem %s6, %s289
          %s291 = smul.u32 2, %s18
        $region44: #{decoder_fc_with_pvp_axis.1} parent=35 // pred_fallthru
          _
      $region36: #{decoder_fc_with_pvp_axis.1} parent=5 // pred_fallthru
        _
      %p292 = scmp.le.s32.totalorder 1, %s18
      %p293 = scmp.lt.s32.totalorder %s18, 3
      %p294 = pnand %p292, %p293
      %p295 = pneg %p294
      // Predicated region
      $region45: #{decoder_fc_with_pvp_axis.1} parent=5 // pred_check
        _
      $region46: #{decoder_fc_with_pvp_axis.1} parent=5 // pred_check_branch
        %297 = sbr.rel (%p294) target = $region48
      $region47: #{decoder_fc_with_pvp_axis.1} parent=5 // pred_region
        %s298 = ssub.s32 %s18, 1
        // Predicated region
        $region49: #{decoder_fc_with_pvp_axis.1} parent=47 // pred_check
          %p299 = pneg %p39
        $region50: #{decoder_fc_with_pvp_axis.1} parent=47 // pred_check_branch
          %301 = sbr.rel (%p299) target = $region52
        $region51: #{decoder_fc_with_pvp_axis.1} parent=47 // pred_region
          %302 = dma.done [#allocation3], 32
        $region52: #{decoder_fc_with_pvp_axis.1} parent=47 // pred_fallthru
          _
        // Predicated region
        $region53: #{decoder_fc_with_pvp_axis.1} parent=47 // pred_check
          %p303 = pneg %p60
        $region54: #{decoder_fc_with_pvp_axis.1} parent=47 // pred_check_branch
          %305 = sbr.rel (%p303) target = $region56
        $region55: #{decoder_fc_with_pvp_axis.1} parent=47 // pred_region
          %306 = dma.done [#allocation5], 512
        $region56: #{decoder_fc_with_pvp_axis.1} parent=47 // pred_fallthru
          _
        // Predicated region
        $region57: #{decoder_fc_with_pvp_axis.1} parent=47 // pred_check
          %p307 = pneg %p102
        $region58: #{decoder_fc_with_pvp_axis.1} parent=47 // pred_check_branch
          %309 = sbr.rel (%p307) target = $region60
        $region59: #{decoder_fc_with_pvp_axis.1} parent=47 // pred_region
          %310 = dma.done [#allocation5], 1024
        $region60: #{decoder_fc_with_pvp_axis.1} parent=47 // pred_fallthru
          _
        %s311 = sand.u32 %s136, 1
        %s312 = scalar_lea.sflag [#allocation8], %s311
        %s313 = sand.u32 %s136, 1
        %s314 = smul.addr %s313, 128
        %s315 = scalar_lea.vmem [#allocation7], %s314
        // Predicated region
        $region61: #{decoder_fc_with_pvp_axis.1} parent=47 // pred_check
          %p316 = pneg %p149
        $region62: #{decoder_fc_with_pvp_axis.1} parent=47 // pred_check_branch
          %318 = sbr.rel (%p316) target = $region64
        $region63: #{decoder_fc_with_pvp_axis.1} parent=47 // pred_region
          %319 = dma.done %s312, 2048
        $region64: #{decoder_fc_with_pvp_axis.1} parent=47 // pred_fallthru
          _
        %p320 = pneg %p39
        %p321 = pneg %p36
        %p322 = pneg %p60
        %p323 = pneg %p57
        %p324 = pneg %p81
        %p325 = pneg %p78
        %p326 = pneg %p102
        %p327 = pneg %p99
        %p328 = pneg %p123
        %p329 = pneg %p120
        %s330 = sand.u32 %s136, 1
        %s331 = scalar_lea.sflag [#allocation8], %s330
        %s332 = sand.u32 %s136, 1
        %s333 = smul.addr %s332, 128
        %s334 = scalar_lea.vmem [#allocation7], %s333
        %p335 = pneg %p149
        %p336 = pneg %p146
        %s337 = smul.u32 2, %s23
        %p338 = scmp.lt.s32.totalorder %s337, 3
        %s339 = scalar_select %p338, %s337, 3
        %s340 = scalar_lea.vmem %s6, %s339
        %p341 = pneg %p175
        %p342 = pneg %p172
        %p343 = pneg %p201
        %p344 = pneg %p198
        %s345 = smul.u32 2, %s23
        %p346 = scmp.lt.s32.totalorder %s345, 3
        %s347 = scalar_select %p346, %s345, 3
        %s348 = smul.addr %s347, 2
        %s349 = scalar_lea.vmem %s7, %s348
        %s350 = smul.u32 2, %s23
        %s351 = smul.u32 2, %s23
        %p352 = scmp.lt.s32.totalorder %s351, 3
        %s353 = scalar_select %p352, %s351, 3
        %s354 = scalar_lea.vmem %s6, %s353
        %s355 = smul.u32 2, %s23
        %s356 = smul.u32 2, %s23
        %p357 = scmp.lt.s32.totalorder %s356, 3
        %s358 = scalar_select %p357, %s356, 3
        %s359 = smul.addr %s358, 2
        %s360 = scalar_lea.vmem %s7, %s359
        %s361 = smul.u32 2, %s23
        %v363 = vld [vmem:[#allocation2] sm:$0x3]
        %v364 = vpack.c.bf16 %v363, %v363
        %v365 = vld [vmem:[#allocation4] sm:$0xf]
        %v366 = vld [vmem:[#allocation4 + $0x4] sm:$0xf]
        %v367 = vld [vmem:[#allocation4 + $0x8] sm:$0xf]
        %v368 = vld [vmem:[#allocation4 + $0xc] sm:$0xf]
        %v369 = vld [vmem:[#allocation4 + $0x10] sm:$0xf]
        %v370 = vld [vmem:[#allocation4 + $0x14] sm:$0xf]
        %v371 = vld [vmem:[#allocation4 + $0x18] sm:$0xf]
        %v372 = vld [vmem:[#allocation4 + $0x1c] sm:$0xf]
        %v373 = vld [vmem:[%s2] sm:$0x1]
        %v375 = vlaneseq
        %v376 = vshrl.u32 %v375, 7
        %v377 = vsub.s32 0, %v376
        %v378 = vrot.slane %v373, %v377
        %v388 = vunpack.c.l.b16 %v365
        %v389 = vunpack.c.l.b16 %v366
        %v390 = vunpack.c.l.b16 %v367
        %v391 = vunpack.c.l.b16 %v368
        %v392 = vunpack.c.l.b16 %v369
        %v393 = vunpack.c.l.b16 %v370
        %v394 = vunpack.c.l.b16 %v371
        %v395 = vunpack.c.l.b16 %v372
        %v396 = vpack.c.b16 %v389, %v388
        %v397 = vpack.c.b16 %v391, %v390
        %v398 = vpack.c.b16 %v393, %v392
        %v399 = vpack.c.b16 %v395, %v394
        %vm404 = vcmask 523264
        %v406 = vsel %vm404, %v364, 0
        %408 = vmatprep.subr.bf16.mxu0 0
        %409 = vmatpush1.bf16.msra.mxu0 %v396
        %410 = vmatprep.subr.bf16.mxu0 0
        %411 = vmatpush1.bf16.msra.mxu0 %v397
        %412 = vmatprep.subr.bf16.mxu0 0
        %413 = vmatpush1.bf16.msra.mxu0 %v398
        %414 = vmatprep.subr.bf16.mxu0 0
        %415 = vmatpush1.bf16.msra.mxu0 %v399
        %416 = vmatprep.subr.bf16.mxu0 0
        %417 = vmatpush1.bf16.msra.mxu0 0
        %418 = vmatprep.subr.bf16.mxu0 0
        %419 = vmatpush1.bf16.msra.mxu0 0
        %420 = vmatprep.subr.bf16.mxu0 0
        %421 = vmatpush1.bf16.msra.mxu0 0
        %422 = vmatprep.subr.bf16.mxu0 0
        %423 = vmatpush1.bf16.msra.mxu0 0
        %424 = vmatprep.subr.bf16.mxu0 0
        %425 = vmatpush1.bf16.msra.mxu0 0
        %426 = vmatprep.subr.bf16.mxu0 0
        %427 = vmatpush1.bf16.msra.mxu0 0
        %428 = vmatprep.subr.bf16.mxu0 0
        %429 = vmatpush1.bf16.msra.mxu0 0
        %430 = vmatprep.subr.bf16.mxu0 0
        %431 = vmatpush1.bf16.msra.mxu0 0
        %432 = vmatprep.subr.bf16.mxu0 0
        %433 = vmatpush1.bf16.msra.mxu0 0
        %434 = vmatprep.subr.bf16.mxu0 0
        %435 = vmatpush1.bf16.msra.mxu0 0
        %436 = vmatprep.subr.bf16.mxu0 0
        %437 = vmatpush1.bf16.msra.mxu0 0
        %438 = vmatprep.subr.bf16.mxu0 0
        %439 = vmatpush1.bf16.msra.mxu0 0
        %440 = vmatprep.mubr.bf16.mxu0 0
        %441 = vmatmul.mubr.bf16.gmra.mrb[0].mxu0 %v406
        %v442 = vpop.f32.mrb[0].mxu0
        %v443 = vadd.f32 %v378, %v442
        %v444 = vpop.f32.mrb[0].mxu0
        %v445 = vpop.f32.mrb[0].mxu0
        %v446 = vpop.f32.mrb[0].mxu0
        %447 = vdwg.mxu0
        %vm448 = vcmp.gt.f32.partialorder %v443, 0.0
        %v449 = vmul.f32 %v443, 0.01
        %v450 = vsel %vm448, %v443, %v449
        %v451 = vpack.c.bf16 %v450, %v450
        %v452 = vld [vmem:[#allocation6] sm:$0xf]
        %v453 = vld [vmem:[#allocation6 + $0x4] sm:$0xf]
        %v454 = vld [vmem:[#allocation6 + $0x8] sm:$0xf]
        %v455 = vld [vmem:[#allocation6 + $0xc] sm:$0xf]
        %v456 = vld [vmem:[#allocation6 + $0x10] sm:$0xf]
        %v457 = vld [vmem:[#allocation6 + $0x14] sm:$0xf]
        %v458 = vld [vmem:[#allocation6 + $0x18] sm:$0xf]
        %v459 = vld [vmem:[#allocation6 + $0x1c] sm:$0xf]
        %v460 = vld [vmem:[#allocation6 + $0x20] sm:$0xf]
        %v461 = vld [vmem:[#allocation6 + $0x24] sm:$0xf]
        %v462 = vld [vmem:[#allocation6 + $0x28] sm:$0xf]
        %v463 = vld [vmem:[#allocation6 + $0x2c] sm:$0xf]
        %v464 = vld [vmem:[#allocation6 + $0x30] sm:$0xf]
        %v465 = vld [vmem:[#allocation6 + $0x34] sm:$0xf]
        %v466 = vld [vmem:[#allocation6 + $0x38] sm:$0xf]
        %v467 = vld [vmem:[#allocation6 + $0x3c] sm:$0xf]
        %v468 = vld [vmem:[%s4] sm:$0x1]
        %v470 = vlaneseq
        %v471 = vshrl.u32 %v470, 7
        %v472 = vsub.s32 0, %v471
        %v473 = vrot.slane %v468, %v472
        %v491 = vunpack.c.l.b16 %v452
        %v492 = vunpack.c.l.b16 %v453
        %v493 = vunpack.c.l.b16 %v454
        %v494 = vunpack.c.l.b16 %v455
        %v495 = vunpack.c.l.b16 %v456
        %v496 = vunpack.c.l.b16 %v457
        %v497 = vunpack.c.l.b16 %v458
        %v498 = vunpack.c.l.b16 %v459
        %v499 = vunpack.c.l.b16 %v460
        %v500 = vunpack.c.l.b16 %v461
        %v501 = vunpack.c.l.b16 %v462
        %v502 = vunpack.c.l.b16 %v463
        %v503 = vunpack.c.l.b16 %v464
        %v504 = vunpack.c.l.b16 %v465
        %v505 = vunpack.c.l.b16 %v466
        %v506 = vunpack.c.l.b16 %v467
        %v507 = vpack.c.b16 %v492, %v491
        %v508 = vpack.c.b16 %v494, %v493
        %v509 = vpack.c.b16 %v496, %v495
        %v510 = vpack.c.b16 %v498, %v497
        %v511 = vpack.c.b16 %v500, %v499
        %v512 = vpack.c.b16 %v502, %v501
        %v513 = vpack.c.b16 %v504, %v503
        %v514 = vpack.c.b16 %v506, %v505
        %523 = vmatprep.subr.bf16.mxu0 0
        %524 = vmatpush1.bf16.msra.mxu0 %v507
        %525 = vmatprep.subr.bf16.mxu0 0
        %526 = vmatpush1.bf16.msra.mxu0 %v508
        %527 = vmatprep.subr.bf16.mxu0 0
        %528 = vmatpush1.bf16.msra.mxu0 %v509
        %529 = vmatprep.subr.bf16.mxu0 0
        %530 = vmatpush1.bf16.msra.mxu0 %v510
        %531 = vmatprep.subr.bf16.mxu0 0
        %532 = vmatpush1.bf16.msra.mxu0 %v511
        %533 = vmatprep.subr.bf16.mxu0 0
        %534 = vmatpush1.bf16.msra.mxu0 %v512
        %535 = vmatprep.subr.bf16.mxu0 0
        %536 = vmatpush1.bf16.msra.mxu0 %v513
        %537 = vmatprep.subr.bf16.mxu0 0
        %538 = vmatpush1.bf16.msra.mxu0 %v514
        %539 = vmatprep.subr.bf16.mxu0 0
        %540 = vmatpush1.bf16.msra.mxu0 0
        %541 = vmatprep.subr.bf16.mxu0 0
        %542 = vmatpush1.bf16.msra.mxu0 0
        %543 = vmatprep.subr.bf16.mxu0 0
        %544 = vmatpush1.bf16.msra.mxu0 0
        %545 = vmatprep.subr.bf16.mxu0 0
        %546 = vmatpush1.bf16.msra.mxu0 0
        %547 = vmatprep.subr.bf16.mxu0 0
        %548 = vmatpush1.bf16.msra.mxu0 0
        %549 = vmatprep.subr.bf16.mxu0 0
        %550 = vmatpush1.bf16.msra.mxu0 0
        %551 = vmatprep.subr.bf16.mxu0 0
        %552 = vmatpush1.bf16.msra.mxu0 0
        %553 = vmatprep.subr.bf16.mxu0 0
        %554 = vmatpush1.bf16.msra.mxu0 0
        %555 = vmatprep.mubr.bf16.mxu0 0
        %556 = vmatmul.mubr.bf16.gmra.mrb[0].mxu0 %v451
        %v557 = vpop.f32.mrb[0].mxu0
        %v558 = vadd.f32 %v473, %v557
        %v559 = vpop.f32.mrb[0].mxu0
        %v560 = vpop.f32.mrb[0].mxu0
        %v561 = vpop.f32.mrb[0].mxu0
        %562 = vdwg.mxu0
        %vm563 = vcmp.gt.f32.partialorder %v558, 0.0
        %v564 = vmul.f32 %v558, 0.01
        %v565 = vsel %vm563, %v558, %v564
        %v566 = vpack.c.bf16 %v565, %v565
        %v567 = vld [vmem:[%s315] sm:$0xff]
        %v568 = vld [vmem:[%s315 + $0x8] sm:$0xff]
        %v569 = vld [vmem:[%s315 + $0x10] sm:$0xff]
        %v570 = vld [vmem:[%s315 + $0x18] sm:$0xff]
        %v571 = vld [vmem:[%s315 + $0x20] sm:$0xff]
        %v572 = vld [vmem:[%s315 + $0x28] sm:$0xff]
        %v573 = vld [vmem:[%s315 + $0x30] sm:$0xff]
        %v574 = vld [vmem:[%s315 + $0x38] sm:$0xff]
        %v575 = vld [vmem:[%s315 + $0x40] sm:$0xff]
        %v576 = vld [vmem:[%s315 + $0x48] sm:$0xff]
        %v577 = vld [vmem:[%s315 + $0x50] sm:$0xff]
        %v578 = vld [vmem:[%s315 + $0x58] sm:$0xff]
        %v579 = vld [vmem:[%s315 + $0x60] sm:$0xff]
        %v580 = vld [vmem:[%s315 + $0x68] sm:$0xff]
        %v581 = vld [vmem:[%s315 + $0x70] sm:$0xff]
        %v582 = vld [vmem:[%s315 + $0x78] sm:$0xff]
        %v583 = vld [vmem:[%s354] sm:$0x3]
        %v585 = vlaneseq
        %v586 = vshrl.u32 %v585, 7
        %v587 = vsub.s32 0, %v586
        %v588 = vrot.slane %v583, %v587
        %v589 = vlaneseq
        %v590 = vshrl.u32 %v589, 7
        %v591 = vsub.s32 1, %v590
        %v592 = vrot.slane %v583, %v591
        %v611 = vunpack.c.l.b16 %v567
        %v612 = vunpack.c.h.b16 %v567
        %v613 = vunpack.c.l.b16 %v568
        %v614 = vunpack.c.h.b16 %v568
        %v615 = vunpack.c.l.b16 %v569
        %v616 = vunpack.c.h.b16 %v569
        %v617 = vunpack.c.l.b16 %v570
        %v618 = vunpack.c.h.b16 %v570
        %v619 = vunpack.c.l.b16 %v571
        %v620 = vunpack.c.h.b16 %v571
        %v621 = vunpack.c.l.b16 %v572
        %v622 = vunpack.c.h.b16 %v572
        %v623 = vunpack.c.l.b16 %v573
        %v624 = vunpack.c.h.b16 %v573
        %v625 = vunpack.c.l.b16 %v574
        %v626 = vunpack.c.h.b16 %v574
        %v627 = vunpack.c.l.b16 %v575
        %v628 = vunpack.c.h.b16 %v575
        %v629 = vunpack.c.l.b16 %v576
        %v630 = vunpack.c.h.b16 %v576
        %v631 = vunpack.c.l.b16 %v577
        %v632 = vunpack.c.h.b16 %v577
        %v633 = vunpack.c.l.b16 %v578
        %v634 = vunpack.c.h.b16 %v578
        %v635 = vunpack.c.l.b16 %v579
        %v636 = vunpack.c.h.b16 %v579
        %v637 = vunpack.c.l.b16 %v580
        %v638 = vunpack.c.h.b16 %v580
        %v639 = vunpack.c.l.b16 %v581
        %v640 = vunpack.c.h.b16 %v581
        %v641 = vunpack.c.l.b16 %v582
        %v642 = vunpack.c.h.b16 %v582
        %v643 = vpack.c.b16 %v613, %v611
        %v644 = vpack.c.b16 %v614, %v612
        %v645 = vpack.c.b16 %v617, %v615
        %v646 = vpack.c.b16 %v618, %v616
        %v647 = vpack.c.b16 %v621, %v619
        %v648 = vpack.c.b16 %v622, %v620
        %v649 = vpack.c.b16 %v625, %v623
        %v650 = vpack.c.b16 %v626, %v624
        %v651 = vpack.c.b16 %v629, %v627
        %v652 = vpack.c.b16 %v630, %v628
        %v653 = vpack.c.b16 %v633, %v631
        %v654 = vpack.c.b16 %v634, %v632
        %v655 = vpack.c.b16 %v637, %v635
        %v656 = vpack.c.b16 %v638, %v636
        %v657 = vpack.c.b16 %v641, %v639
        %v658 = vpack.c.b16 %v642, %v640
        %675 = vmatprep.subr.bf16.mxu0 %v644
        %676 = vmatpush1.bf16.msra.mxu0 %v643
        %677 = vmatprep.subr.bf16.mxu0 %v646
        %678 = vmatpush1.bf16.msra.mxu0 %v645
        %679 = vmatprep.subr.bf16.mxu0 %v648
        %680 = vmatpush1.bf16.msra.mxu0 %v647
        %681 = vmatprep.subr.bf16.mxu0 %v650
        %682 = vmatpush1.bf16.msra.mxu0 %v649
        %683 = vmatprep.subr.bf16.mxu0 %v652
        %684 = vmatpush1.bf16.msra.mxu0 %v651
        %685 = vmatprep.subr.bf16.mxu0 %v654
        %686 = vmatpush1.bf16.msra.mxu0 %v653
        %687 = vmatprep.subr.bf16.mxu0 %v656
        %688 = vmatpush1.bf16.msra.mxu0 %v655
        %689 = vmatprep.subr.bf16.mxu0 %v658
        %690 = vmatpush1.bf16.msra.mxu0 %v657
        %691 = vmatprep.subr.bf16.mxu0 0
        %692 = vmatpush1.bf16.msra.mxu0 0
        %693 = vmatprep.subr.bf16.mxu0 0
        %694 = vmatpush1.bf16.msra.mxu0 0
        %695 = vmatprep.subr.bf16.mxu0 0
        %696 = vmatpush1.bf16.msra.mxu0 0
        %697 = vmatprep.subr.bf16.mxu0 0
        %698 = vmatpush1.bf16.msra.mxu0 0
        %699 = vmatprep.subr.bf16.mxu0 0
        %700 = vmatpush1.bf16.msra.mxu0 0
        %701 = vmatprep.subr.bf16.mxu0 0
        %702 = vmatpush1.bf16.msra.mxu0 0
        %703 = vmatprep.subr.bf16.mxu0 0
        %704 = vmatpush1.bf16.msra.mxu0 0
        %705 = vmatprep.subr.bf16.mxu0 0
        %706 = vmatpush1.bf16.msra.mxu0 0
        %707 = vmatprep.mubr.bf16.mxu0 0
        %708 = vmatmul.mubr.bf16.gmra.mrb[0].mxu0 %v566
        %v709 = vpop.f32.mrb[0].mxu0
        %v710 = vadd.f32 %v588, %v709
        %v711 = vpop.f32.mrb[0].mxu0
        %v712 = vadd.f32 %v592, %v711
        %v713 = vpop.f32.mrb[0].mxu0
        %v714 = vpop.f32.mrb[0].mxu0
        %715 = vdwg.mxu0
        %v716 = vmul.f32 %v710, 0.5
        %v717 = vmul.f32 %v712, 0.5
        %v718 = vtanh.pop %v716
        %v719 = vtanh.pop %v717
        %v720 = vmul.f32 %v718, 0.5
        %v721 = vmul.f32 %v719, 0.5
        %v722 = vadd.f32 %v720, 0.5
        %v723 = vadd.f32 %v721, 0.5
        %v726 = vcombine.low %v722, %v723
        %v728 = vunpack.c.l.s4 1983009808
        %v729 = vunpack.c.0.s8 %v728
        %v730 = vlaneseq
        %v731 = vshrl.u32 %v730, 7
        %v732 = vsub.s32 %v729, %v731
        %v733 = vrot.slane %v726, %v732
        %735 = vst [vmem:[%s360] sm:$0xf] %v733
        %s736 = smul.u32 2, %s23
        %p737 = scmp.lt.s32.totalorder %s736, 3
        %s738 = scalar_select %p737, %s736, 3
        %s739 = smul.addr %s738, 2
        %s740 = scalar_lea.vmem %s7, %s739
        // Predicated region
        $region65: #{decoder_fc_with_pvp_axis.1} parent=47 // pred_check
          %p741 = pneg %p198
        $region66: #{decoder_fc_with_pvp_axis.1} parent=47 // pred_check_branch
          %743 = sbr.rel (%p741) target = $region68
        $region67: #{decoder_fc_with_pvp_axis.1} parent=47 // pred_region
          %s744 = smul.u32 2, %s23
        $region68: #{decoder_fc_with_pvp_axis.1} parent=47 // pred_fallthru
          _
      $region48: #{decoder_fc_with_pvp_axis.1} parent=5 // pred_fallthru
        _
      %p745 = scmp.le.s32.totalorder 2, %s18
      // Predicated region
      $region69: #{decoder_fc_with_pvp_axis.1} parent=5 // pred_check
        %p746 = pneg %p745
      $region70: #{decoder_fc_with_pvp_axis.1} parent=5 // pred_check_branch
        %748 = sbr.rel (%p746) target = $region72
      $region71: #{decoder_fc_with_pvp_axis.1} parent=5 // pred_region
        %s749 = ssub.s32 %s18, 2
        // Predicated region
        $region73: #{decoder_fc_with_pvp_axis.1} parent=71 // pred_check
          %p750 = pneg %p204
        $region74: #{decoder_fc_with_pvp_axis.1} parent=71 // pred_check_branch
          %752 = sbr.rel (%p750) target = $region76
        $region75: #{decoder_fc_with_pvp_axis.1} parent=71 // pred_region
          %s753 = smul.u32 2, %s24
          %p754 = scmp.lt.s32.totalorder %s753, 3
          %s755 = scalar_select %p754, %s753, 3
          %s756 = smul.addr %s755, 2
          %s757 = scalar_lea.vmem %s7, %s756
        $region76: #{decoder_fc_with_pvp_axis.1} parent=71 // pred_fallthru
          _
      $region72: #{decoder_fc_with_pvp_axis.1} parent=5 // pred_fallthru
        _
    $region6: #{decoder_fc_with_pvp_axis.1} parent=1 // loop_footer
      %s22 = sadd.s32 1, %s18
    $region7: #{decoder_fc_with_pvp_axis.1} parent=1 // loop_footer_branch
      %17 = sbr.rel target = $region3
    $region8: #{decoder_fc_with_pvp_axis.1} parent=1 // loop_exit
      _
    %758 = vsyncpa [#allocation3], 1
    %s759 = scalar_lea.sflag [#allocation3], 1
    %760 = vsyncpa %s759, 1
    %761 = vsyncpa [#allocation5], 1
    %762 = vsyncpa [#allocation8], 1
    %s763 = scalar_lea.sflag [#allocation8], 1
    %764 = vsyncpa %s763, 1

</llo_original>
